<compile_context>
chip_gen: v5e
topology: v5e:2x2
jax: 0.10.0
libtpu: 0.0.40
codegen_flags: <defaults>
</compile_context>

<pallas_src>
import functools

import jax
import jax.numpy as jnp
from jax.experimental import pallas as pl
from jax.experimental.pallas import tpu as pltpu

# Hyper-parameters (module __init__ defaults)
EPS = 0.1
THRESHOLD = 0.5
ALPHA = 2.0
BETA = 50.0


def _round_up(x, m):
    return ((x + m - 1) // m) * m


def _pick_default_tq():
    """Query tile: 256 fills the 2x256 MXU on v6e/v7x; v5e's MXU is 128-wide."""
    try:
        info = pltpu.get_tpu_info()
        name = (str(getattr(info, "chip_version", "")) + " "
                + str(getattr(info, "name", ""))).lower()
        if "v5" in name or "5e" in name:
            return 128
    except Exception:
        pass
    return 256


def _ms_loss_kernel(feat_ref, lab_col_ref, lab_row_ref, out_ref, *,
                    tq, batch, batch_pad):
    i = pl.program_id(0)

    # (TQ, B_pad) similarity tile on the MXU: NT matmul (contract last dim of
    # both operands), bf16 operands, f32 accumulation.  No explicit transpose.
    q_start = pl.multiple_of(i * tq, tq)
    q = feat_ref[pl.ds(q_start, tq), :]                              # (TQ, D)
    sim = jax.lax.dot_general(
        q, feat_ref[...],
        dimension_numbers=(((1,), (1,)), ((), ())),
        preferred_element_type=jnp.float32)                          # (TQ, B_pad) f32

    matches = lab_col_ref[...] == lab_row_ref[...]                   # (TQ, B_pad) bool
    if batch_pad != batch:
        # Padded key columns never participate.
        col_valid = jax.lax.broadcasted_iota(jnp.int32, (1, batch_pad), 1) < batch
        pos_keep = matches & col_valid
        neg_keep = jnp.logical_not(matches) & col_valid
    else:
        pos_keep = matches
        neg_keep = jnp.logical_not(matches)

    # Row-wise extrema (one select feeding each lane-axis reduction).
    min_pos = jnp.min(jnp.where(pos_keep, sim, jnp.inf), axis=1, keepdims=True)   # (TQ,1)
    max_neg = jnp.max(jnp.where(neg_keep, sim, -jnp.inf), axis=1, keepdims=True)  # (TQ,1)

    # LSE(add_one) maxima derived from the extrema (no second masked max-reduce):
    #   non-empty keep set  -> its extreme element is kept, so this IS the max;
    #   empty keep set      -> any finite m gives  m + log(exp(-m)) = 0  exactly.
    m_pos = jnp.maximum(ALPHA * (THRESHOLD - min_pos), 0.0)          # (TQ,1) finite
    m_neg = jnp.maximum(BETA * (max_neg - THRESHOLD), 0.0)           # (TQ,1) finite

    # keep-masks per the module:
    #   pos_mask = matches & (sim < max_neg + eps)
    #   neg_mask = ~matches & (sim > min_pos - eps)
    # Affine scale+shift folded into the exp argument; masked entries -> -inf -> exp 0.
    pos_arg = jnp.where(pos_keep & (sim < max_neg + EPS),
                        (ALPHA * THRESHOLD - m_pos) - ALPHA * sim, -jnp.inf)
    neg_arg = jnp.where(neg_keep & (sim > min_pos - EPS),
                        BETA * sim - (BETA * THRESHOLD + m_neg), -jnp.inf)

    pos_sum = jnp.sum(jnp.exp(pos_arg), axis=1, keepdims=True) + jnp.exp(-m_pos)
    neg_sum = jnp.sum(jnp.exp(neg_arg), axis=1, keepdims=True) + jnp.exp(-m_neg)

    row_loss = ((m_pos + jnp.log(pos_sum)) * (1.0 / ALPHA)
                + (m_neg + jnp.log(neg_sum)) * (1.0 / BETA))         # (TQ, 1)

    if batch_pad != batch:
        # Padded query rows must not contribute to the mean.
        row_idx = q_start + jax.lax.broadcasted_iota(jnp.int32, (tq, 1), 0)
        row_loss = jnp.where(row_idx < batch, row_loss, 0.0)

    # Per-tile partial sum, written as a full lane/sublane-aligned (8,128) block
    # (value broadcast); the wrapper picks element [0] of each block and sums.
    partial = jnp.sum(row_loss, axis=0, keepdims=True)               # (1, 1)
    out_ref[...] = jnp.broadcast_to(partial, out_ref.shape)


def multi_similarity_loss(features, labels, *, tq=None,
                          matmul_dtype=jnp.bfloat16, vmem_limit_bytes=None):
    """features: (B, D), labels: (B,) int. Returns scalar float32 loss.

    tq: query-row tile size (multiple of 8). Default: 256 on v6e/v7x, 128 on v5e.
    matmul_dtype: MXU operand dtype for the similarity matmul (bf16 default;
                  pass jnp.float32 for an exact-precision path).
    """
    B, D = features.shape
    if tq is None:
        tq = _pick_default_tq()
    tq = _round_up(max(8, int(tq)), 8)
    b_keys = _round_up(B, 128)          # lane-dense key/column dimension
    tq = min(tq, b_keys)
    b_pad = _round_up(b_keys, tq)       # rows divisible by the query tile
    num_tiles = b_pad // tq

    # L2-normalize in f32 in the wrapper (XLA fuses it); the kernel receives
    # MXU-ready operands and keeps a single resident copy of them in VMEM.
    x = features.astype(jnp.float32)
    x = x * jax.lax.rsqrt(
        jnp.maximum(jnp.sum(x * x, axis=1, keepdims=True), 1e-24))  # == x / max(||x||,1e-12)
    x = x.astype(matmul_dtype)

    labels = labels.astype(jnp.int32)
    if b_pad != B:
        x = jnp.pad(x, ((0, b_pad - B), (0, 0)))
        labels = jnp.pad(labels, ((0, b_pad - B),))
    lab_col = labels.reshape(b_pad, 1)
    lab_row = labels.reshape(1, b_pad)

    kernel = functools.partial(_ms_loss_kernel, tq=tq, batch=B, batch_pad=b_pad)

    itemsize = jnp.dtype(matmul_dtype).itemsize
    if vmem_limit_bytes is None:
        feat_bytes = b_pad * D * itemsize              # resident features (per buffer)
        work_bytes = 8 * tq * b_pad * 4                # sim tile + elementwise temporaries
        misc_bytes = 2 * (tq * 128 + 8 * b_pad) * 4 + 2 * 8 * 128 * 4  # labels + out blocks
        vmem_limit_bytes = max(2 * feat_bytes + work_bytes + misc_bytes + (4 << 20),
                               32 << 20)

    cost = pl.CostEstimate(
        flops=2 * b_pad * b_pad * D,
        transcendentals=2 * b_pad * b_pad,
        bytes_accessed=b_pad * D * itemsize + 2 * b_pad * 4 + num_tiles * 8 * 128 * 4)

    partials = pl.pallas_call(
        kernel,
        out_shape=jax.ShapeDtypeStruct((num_tiles * 8, 128), jnp.float32),
        grid_spec=pltpu.PrefetchScalarGridSpec(
            num_scalar_prefetch=0,
            grid=(num_tiles,),
            in_specs=[
                pl.BlockSpec((b_pad, D), lambda i: (0, 0)),   # normalized features, resident
                pl.BlockSpec((tq, 1), lambda i: (i, 0)),      # query-tile labels
                pl.BlockSpec((1, b_pad), lambda i: (0, 0)),   # all labels (row), resident
            ],
            out_specs=pl.BlockSpec((8, 128), lambda i: (i, 0)),   # per-tile partial sum
        ),
        compiler_params=pltpu.CompilerParams(
            dimension_semantics=("parallel",),                # no cross-step state left
            vmem_limit_bytes=int(vmem_limit_bytes)),
        cost_estimate=cost,
    )(x, lab_col, lab_row)

    return jnp.sum(partials[::8, 0]) / B


# ----------------------------------------------------------------------------
# Pure-JAX reference mirroring the PyTorch forward (independent formulation).
# ----------------------------------------------------------------------------
def _masked_lse_add_one(vals, mask):
    """torch logsumexp(x, keep_mask=mask, add_one=True): masked entries -> -inf,
    an exp(0)=1 term is appended, all-false rows yield exactly 0."""
    xm = jnp.where(mask, vals, -jnp.inf)
    m = jnp.maximum(jnp.max(xm, axis=1, keepdims=True), 0.0)
    s = jnp.sum(jnp.exp(xm - m), axis=1, keepdims=True) + jnp.exp(-m)
    return m + jnp.log(s)


def _reference_loss(features, labels, matmul_dtype=jnp.float32):
    """matmul_dtype controls the similarity-matmul operand precision so the
    kernel (bf16 MXU operands, f32 accumulation) can be checked tightly, while
    matmul_dtype=float32 (HIGHEST precision) gives the exact module math."""
    x = features.astype(jnp.float32)
    x = x * jax.lax.rsqrt(jnp.maximum(jnp.sum(x * x, axis=1, keepdims=True), 1e-24))
    xm = x.astype(matmul_dtype)
    prec = jax.lax.Precision.HIGHEST if jnp.dtype(matmul_dtype) == jnp.dtype(jnp.float32) else None
    sim = jnp.dot(xm, xm.T, preferred_element_type=jnp.float32, precision=prec)
    sim = sim.astype(jnp.float32)

    matches = labels[:, None] == labels[None, :]
    min_pos = jnp.min(jnp.where(matches, sim, jnp.inf), axis=1, keepdims=True)
    max_neg = jnp.max(jnp.where(matches, -jnp.inf, sim), axis=1, keepdims=True)
    pos_mask = matches & (sim < (max_neg + EPS))
    neg_mask = (~matches) & (sim > (min_pos - EPS))
    p = _masked_lse_add_one(ALPHA * (THRESHOLD - sim), pos_mask) / ALPHA
    n = _masked_lse_add_one(BETA * (sim - THRESHOLD), neg_mask) / BETA
    return jnp.mean(p + n)


if __name__ == "__main__":
    key = jax.random.PRNGKey(0)
    kf1, kl1, kf2, kl2 = jax.random.split(key, 4)

    # Case 1: small, single-tile path (default auto-picked tile).
    B1, D = 8, 32
    feats1 = jax.random.normal(kf1, (B1, D), dtype=jnp.float32)
    labels1 = jax.random.randint(kl1, (B1,), 0, 4, dtype=jnp.int32)

    loss1 = jax.block_until_ready(multi_similarity_loss(feats1, labels1))
    # Tight check vs. a reference using the same bf16 MXU operand precision.
    ref1_bf16 = jax.block_until_ready(_reference_loss(feats1, labels1, jnp.bfloat16))
    assert jnp.allclose(loss1, ref1_bf16, atol=2e-3, rtol=2e-3), (loss1, ref1_bf16)
    # Gross sanity check vs. the exact-f32 module math (bf16 operands perturb
    # sim by ~1e-3, amplified by beta=50 in the negative branch).
    ref1_f32 = jax.block_until_ready(_reference_loss(feats1, labels1, jnp.float32))
    assert abs(float(loss1) - float(ref1_f32)) < 2e-1, (loss1, ref1_f32)

    # Case 2: exercises the multi-tile "parallel" grid, per-tile partial sums,
    # and the row/column padding masks (B=20 padded to 128 lanes, TQ=8).
    B2 = 20
    feats2 = jax.random.normal(kf2, (B2, D), dtype=jnp.float32)
    labels2 = jax.random.randint(kl2, (B2,), 0, 5, dtype=jnp.int32)

    loss2 = jax.block_until_ready(multi_similarity_loss(feats2, labels2, tq=8))
    ref2_bf16 = jax.block_until_ready(_reference_loss(feats2, labels2, jnp.bfloat16))
    assert jnp.allclose(loss2, ref2_bf16, atol=2e-3, rtol=2e-3), (loss2, ref2_bf16)
    ref2_f32 = jax.block_until_ready(_reference_loss(feats2, labels2, jnp.float32))
    assert abs(float(loss2) - float(ref2_f32)) < 2e-1, (loss2, ref2_f32)

    print("KERNEL_OK")
</pallas_src>

<mosaic_0001>
module attributes {stable_mosaic.version = 11 : i64} {
  func.func @_ms_loss_kernel(%arg0: i32, %arg1: memref<128x32xbf16, #tpu.memory_space<vmem>>, %arg2: memref<128x1xi32, #tpu.memory_space<vmem>>, %arg3: memref<1x128xi32, #tpu.memory_space<vmem>>, %arg4: memref<8x128xf32, #tpu.memory_space<vmem>>) attributes {dimension_semantics = [#tpu.dimension_semantics<parallel>], iteration_bounds = array<i64: 1>, scalar_prefetch = 0 : i64, scratch_operands = 0 : i64, tpu.core_type = #tpu.core_type<tc>, window_params = [{pipeline_mode = #tpu.pipeline_mode<synchronous>, transform_indices = @transform_0, window_bounds = array<i64: 128, 32>}, {transform_indices = @transform_1, window_bounds = array<i64: 128, 1>}, {pipeline_mode = #tpu.pipeline_mode<synchronous>, transform_indices = @transform_2, window_bounds = array<i64: 1, 128>}, {transform_indices = @transform_3, window_bounds = array<i64: 8, 128>}]} {
    %c128_i32 = arith.constant 128 : i32
    %0 = arith.muli %arg0, %c128_i32 : i32
    %1 = tpu.assume_multiple %0, 128 : i32
    %2 = arith.index_cast %1 : i32 to index
    %c0 = arith.constant 0 : index
    %3 = vector.load %arg1[%2, %c0] : memref<128x32xbf16, #tpu.memory_space<vmem>>, vector<128x32xbf16>
    %c0_0 = arith.constant 0 : index
    %c0_1 = arith.constant 0 : index
    %4 = vector.load %arg1[%c0_0, %c0_1] : memref<128x32xbf16, #tpu.memory_space<vmem>>, vector<128x32xbf16>
    %cst = arith.constant dense<0.000000e+00> : vector<128x128xf32>
    %5 = tpu.matmul %3, %4, %cst {dimension_numbers = #tpu.dot_dimension_numbers<[1], [1], [0], [0], [0, 0, 1, 0], [], []>} : vector<128x32xbf16>, vector<128x32xbf16>, vector<128x128xf32> -> vector<128x128xf32>
    %c0_2 = arith.constant 0 : index
    %c0_3 = arith.constant 0 : index
    %6 = vector.load %arg2[%c0_2, %c0_3] : memref<128x1xi32, #tpu.memory_space<vmem>>, vector<128x1xi32>
    %c0_4 = arith.constant 0 : index
    %c0_5 = arith.constant 0 : index
    %7 = vector.load %arg3[%c0_4, %c0_5] : memref<1x128xi32, #tpu.memory_space<vmem>>, vector<1x128xi32>
    %8 = vector.broadcast %6 : vector<128x1xi32> to vector<128x128xi32>
    %9 = vector.broadcast %7 : vector<1x128xi32> to vector<128x128xi32>
    %10 = arith.cmpi eq, %8, %9 : vector<128x128xi32>
    %11 = tpu.iota {dimensions = array<i32: 1>} : vector<1x128xi32>
    %c8_i32 = arith.constant 8 : i32
    %12 = vector.broadcast %c8_i32 : i32 to vector<1x128xi32>
    %13 = arith.cmpi slt, %11, %12 : vector<1x128xi32>
    %14 = vector.broadcast %13 : vector<1x128xi1> to vector<128x128xi1>
    %15 = arith.andi %10, %14 : vector<128x128xi1>
    %cst_6 = arith.constant dense<true> : vector<128x128xi1>
    %16 = arith.xori %10, %cst_6 : vector<128x128xi1>
    %17 = vector.broadcast %13 : vector<1x128xi1> to vector<128x128xi1>
    %18 = arith.andi %16, %17 : vector<128x128xi1>
    %cst_7 = arith.constant 0x7F800000 : f32
    %19 = vector.broadcast %cst_7 : f32 to vector<128x128xf32>
    %20 = arith.select %15, %5, %19 : vector<128x128xi1>, vector<128x128xf32>
    %cst_8 = arith.constant dense<0x7F800000> : vector<128xf32>
    %21 = vector.multi_reduction <minimumf>, %20, %cst_8 [1] : vector<128x128xf32> to vector<128xf32>
    %22 = vector.shape_cast %21 : vector<128xf32> to vector<128x1xf32>
    %cst_9 = arith.constant 0xFF800000 : f32
    %23 = vector.broadcast %cst_9 : f32 to vector<128x128xf32>
    %24 = arith.select %18, %5, %23 : vector<128x128xi1>, vector<128x128xf32>
    %cst_10 = arith.constant dense<0xFF800000> : vector<128xf32>
    %25 = vector.multi_reduction <maximumf>, %24, %cst_10 [1] : vector<128x128xf32> to vector<128xf32>
    %26 = vector.shape_cast %25 : vector<128xf32> to vector<128x1xf32>
    %cst_11 = arith.constant 5.000000e-01 : f32
    %27 = vector.broadcast %cst_11 : f32 to vector<128x1xf32>
    %28 = arith.subf %27, %22 : vector<128x1xf32>
    %cst_12 = arith.constant 2.000000e+00 : f32
    %29 = vector.broadcast %cst_12 : f32 to vector<128x1xf32>
    %30 = arith.mulf %29, %28 : vector<128x1xf32>
    %cst_13 = arith.constant 0.000000e+00 : f32
    %31 = vector.broadcast %cst_13 : f32 to vector<128x1xf32>
    %32 = arith.maximumf %30, %31 : vector<128x1xf32>
    %cst_14 = arith.constant 5.000000e-01 : f32
    %33 = vector.broadcast %cst_14 : f32 to vector<128x1xf32>
    %34 = arith.subf %26, %33 : vector<128x1xf32>
    %cst_15 = arith.constant 5.000000e+01 : f32
    %35 = vector.broadcast %cst_15 : f32 to vector<128x1xf32>
    %36 = arith.mulf %35, %34 : vector<128x1xf32>
    %cst_16 = arith.constant 0.000000e+00 : f32
    %37 = vector.broadcast %cst_16 : f32 to vector<128x1xf32>
    %38 = arith.maximumf %36, %37 : vector<128x1xf32>
    %cst_17 = arith.constant 1.000000e-01 : f32
    %39 = vector.broadcast %cst_17 : f32 to vector<128x1xf32>
    %40 = arith.addf %26, %39 : vector<128x1xf32>
    %41 = vector.broadcast %40 : vector<128x1xf32> to vector<128x128xf32>
    %42 = arith.cmpf olt, %5, %41 : vector<128x128xf32>
    %43 = arith.andi %15, %42 : vector<128x128xi1>
    %cst_18 = arith.constant 1.000000e+00 : f32
    %44 = vector.broadcast %cst_18 : f32 to vector<128x1xf32>
    %45 = arith.subf %44, %32 : vector<128x1xf32>
    %cst_19 = arith.constant 2.000000e+00 : f32
    %46 = vector.broadcast %cst_19 : f32 to vector<128x128xf32>
    %47 = arith.mulf %46, %5 : vector<128x128xf32>
    %48 = vector.broadcast %45 : vector<128x1xf32> to vector<128x128xf32>
    %49 = arith.subf %48, %47 : vector<128x128xf32>
    %cst_20 = arith.constant 0xFF800000 : f32
    %50 = vector.broadcast %cst_20 : f32 to vector<128x128xf32>
    %51 = arith.select %43, %49, %50 : vector<128x128xi1>, vector<128x128xf32>
    %cst_21 = arith.constant 1.000000e-01 : f32
    %52 = vector.broadcast %cst_21 : f32 to vector<128x1xf32>
    %53 = arith.subf %22, %52 : vector<128x1xf32>
    %54 = vector.broadcast %53 : vector<128x1xf32> to vector<128x128xf32>
    %55 = arith.cmpf ogt, %5, %54 : vector<128x128xf32>
    %56 = arith.andi %18, %55 : vector<128x128xi1>
    %cst_22 = arith.constant 5.000000e+01 : f32
    %57 = vector.broadcast %cst_22 : f32 to vector<128x128xf32>
    %58 = arith.mulf %57, %5 : vector<128x128xf32>
    %cst_23 = arith.constant 2.500000e+01 : f32
    %59 = vector.broadcast %cst_23 : f32 to vector<128x1xf32>
    %60 = arith.addf %59, %38 : vector<128x1xf32>
    %61 = vector.broadcast %60 : vector<128x1xf32> to vector<128x128xf32>
    %62 = arith.subf %58, %61 : vector<128x128xf32>
    %cst_24 = arith.constant 0xFF800000 : f32
    %63 = vector.broadcast %cst_24 : f32 to vector<128x128xf32>
    %64 = arith.select %56, %62, %63 : vector<128x128xi1>, vector<128x128xf32>
    %65 = math.exp %51 : vector<128x128xf32>
    %cst_25 = arith.constant dense<0.000000e+00> : vector<128xf32>
    %66 = vector.multi_reduction <add>, %65, %cst_25 [1] : vector<128x128xf32> to vector<128xf32>
    %67 = vector.shape_cast %66 : vector<128xf32> to vector<128x1xf32>
    %cst_26 = arith.constant 0.000000e+00 : f32
    %68 = vector.broadcast %cst_26 : f32 to vector<128x1xf32>
    %69 = arith.subf %68, %32 : vector<128x1xf32>
    %70 = math.exp %69 : vector<128x1xf32>
    %71 = arith.addf %67, %70 : vector<128x1xf32>
    %72 = math.exp %64 : vector<128x128xf32>
    %cst_27 = arith.constant dense<0.000000e+00> : vector<128xf32>
    %73 = vector.multi_reduction <add>, %72, %cst_27 [1] : vector<128x128xf32> to vector<128xf32>
    %74 = vector.shape_cast %73 : vector<128xf32> to vector<128x1xf32>
    %cst_28 = arith.constant 0.000000e+00 : f32
    %75 = vector.broadcast %cst_28 : f32 to vector<128x1xf32>
    %76 = arith.subf %75, %38 : vector<128x1xf32>
    %77 = math.exp %76 : vector<128x1xf32>
    %78 = arith.addf %74, %77 : vector<128x1xf32>
    %79 = math.log %71 : vector<128x1xf32>
    %80 = arith.addf %32, %79 : vector<128x1xf32>
    %cst_29 = arith.constant 5.000000e-01 : f32
    %81 = vector.broadcast %cst_29 : f32 to vector<128x1xf32>
    %82 = arith.mulf %80, %81 : vector<128x1xf32>
    %83 = math.log %78 : vector<128x1xf32>
    %84 = arith.addf %38, %83 : vector<128x1xf32>
    %cst_30 = arith.constant 2.000000e-02 : f32
    %85 = vector.broadcast %cst_30 : f32 to vector<128x1xf32>
    %86 = arith.mulf %84, %85 : vector<128x1xf32>
    %87 = arith.addf %82, %86 : vector<128x1xf32>
    %88 = tpu.iota {dimensions = array<i32: 0>} : vector<128x1xi32>
    %89 = vector.broadcast %1 : i32 to vector<128x1xi32>
    %90 = arith.addi %89, %88 : vector<128x1xi32>
    %c8_i32_31 = arith.constant 8 : i32
    %91 = vector.broadcast %c8_i32_31 : i32 to vector<128x1xi32>
    %92 = arith.cmpi slt, %90, %91 : vector<128x1xi32>
    %cst_32 = arith.constant 0.000000e+00 : f32
    %93 = vector.broadcast %cst_32 : f32 to vector<128x1xf32>
    %94 = arith.select %92, %87, %93 : vector<128x1xi1>, vector<128x1xf32>
    %cst_33 = arith.constant dense<0.000000e+00> : vector<1xf32>
    %95 = vector.multi_reduction <add>, %94, %cst_33 [0] : vector<128x1xf32> to vector<1xf32>
    %96 = vector.shape_cast %95 : vector<1xf32> to vector<1x1xf32>
    %97 = vector.shape_cast %96 : vector<1x1xf32> to vector<1x1xf32>
    %98 = vector.broadcast %97 : vector<1x1xf32> to vector<8x128xf32>
    %c0_34 = arith.constant 0 : index
    %c0_35 = arith.constant 0 : index
    %99 = vector.load %arg4[%c0_34, %c0_35] : memref<8x128xf32, #tpu.memory_space<vmem>>, vector<8x128xf32>
    tpu.vector_store %arg4[%c0_34, %c0_35], %98 {strides = array<i32>} : memref<8x128xf32, #tpu.memory_space<vmem>>, vector<8x128xf32>,
    return
  }
  func.func @transform_0(%arg0: i32) -> (i32, i32) {
    %c0_i32 = arith.constant 0 : i32
    %c0_i32_0 = arith.constant 0 : i32
    %c0_i32_1 = arith.constant 0 : i32
    return %c0_i32, %c0_i32_0 : i32, i32
  }
  func.func @transform_1(%arg0: i32) -> (i32, i32) {
    %c0_i32 = arith.constant 0 : i32
    %c0_i32_0 = arith.constant 0 : i32
    return %arg0, %c0_i32 : i32, i32
  }
  func.func @transform_2(%arg0: i32) -> (i32, i32) {
    %c0_i32 = arith.constant 0 : i32
    %c0_i32_0 = arith.constant 0 : i32
    %c0_i32_1 = arith.constant 0 : i32
    return %c0_i32, %c0_i32_0 : i32, i32
  }
  func.func @transform_3(%arg0: i32) -> (i32, i32) {
    %c0_i32 = arith.constant 0 : i32
    %c0_i32_0 = arith.constant 0 : i32
    return %arg0, %c0_i32 : i32, i32
  }
}

</mosaic_0001>

<llo_original>
// kernel: tpu_custom_call.1
$region0: #{tpu_custom_call.1}
  #allocation0 [shape = 'u32[]', space=smem, size = 0x4, offset = 0x4, fixed_abs, tag = 'smem constant byte address 0x4 - core index']
  #allocation1 [shape = 'u32[72,128]{1,0:T(1,128)}', space=vmem, size = 0x9000, scoped, tag = 'internal scratch']
  %s0 = inlined_call_operand.vmem [shape: bf16[128,32], index: 0, kind: input, shape index: {}]
  %s1 = inlined_call_operand.vmem [shape: s32[128,1], index: 1, kind: input, shape index: {}]
  %s2 = inlined_call_operand.vmem [shape: s32[1,128], index: 2, kind: input, shape index: {}]
  %s3 = inlined_call_operand.hbm [shape: f32[8,128], index: 3, kind: output, shape index: {}]
  %s4 = sld [smem:[#allocation0]]
  $region22: #{tpu_custom_call.1} parent=0
    _
  %s6 = ssub.s32 1, %s4
  %s7 = scalar_select 0, %s6, %s4
  $region1: #{tpu_custom_call.1} parent=0
    #allocation2 [shape = 'u8[4096]{0}', space=vmem, size = 0x1000, scoped, tag = 'output window, operand 0, single buffered']
    #allocation3 [shape = 's32[1]{0}', space=sflag, size = 0x4, scoped, tag = 'scoped memory for tpu_custom_call.1']
    %8 = vsyncpa [#allocation3], 0
    // Predicated region
    $region2: #{tpu_custom_call.1} parent=1 // pred_check
      _
    $region3: #{tpu_custom_call.1} parent=1 // pred_check_branch
      %10 = sbr.rel (0) target = $region5
    $region4: #{tpu_custom_call.1} parent=1 // pred_region
      _
    $region5: #{tpu_custom_call.1} parent=1 // pred_fallthru
      _
    // Predicated region
    $region6: #{tpu_custom_call.1} parent=1 // pred_check
      _
    $region7: #{tpu_custom_call.1} parent=1 // pred_check_branch
      %12 = sbr.rel (0) target = $region9
    $region8: #{tpu_custom_call.1} parent=1 // pred_region
      _
    $region9: #{tpu_custom_call.1} parent=1 // pred_fallthru
      _
    // Predicated region
    $region10: #{tpu_custom_call.1} parent=1 // pred_check
      _
    $region11: #{tpu_custom_call.1} parent=1 // pred_check_branch
      %14 = sbr.rel (0) target = $region13
    $region12: #{tpu_custom_call.1} parent=1 // pred_region
      _
    $region13: #{tpu_custom_call.1} parent=1 // pred_fallthru
      _
    %s15 = smul.u32 0, 128
    %s16 = sshra.s32 %s15, 3
    %s17 = sand.u32 %s15, 7
    %s18 = smul.addr %s16, 4
    %s19 = scalar_lea.vmem %s0, %s18
    %v20 = vld [vmem:[%s19] sm:$0xf]
    %v21 = vld [vmem:[%s19 + $0x4] sm:$0xf]
    %v22 = vld [vmem:[%s19 + $0x8] sm:$0xf]
    %v23 = vld [vmem:[%s19 + $0xc] sm:$0xf]
    %v24 = vld [vmem:[%s19 + $0x10] sm:$0xf]
    %v25 = vld [vmem:[%s19 + $0x14] sm:$0xf]
    %v26 = vld [vmem:[%s19 + $0x18] sm:$0xf]
    %v27 = vld [vmem:[%s19 + $0x1c] sm:$0xf]
    %v28 = vld [vmem:[%s19 + $0x20] sm:$0xf]
    %v29 = vld [vmem:[%s19 + $0x24] sm:$0xf]
    %v30 = vld [vmem:[%s19 + $0x28] sm:$0xf]
    %v31 = vld [vmem:[%s19 + $0x2c] sm:$0xf]
    %v32 = vld [vmem:[%s19 + $0x30] sm:$0xf]
    %v33 = vld [vmem:[%s19 + $0x34] sm:$0xf]
    %v34 = vld [vmem:[%s19 + $0x38] sm:$0xf]
    %v35 = vld [vmem:[%s19 + $0x3c] sm:$0xf]
    %v36 = vld [vmem:[%s0] sm:$0xf]
    %v37 = vld [vmem:[%s0 + $0x4] sm:$0xf]
    %v38 = vld [vmem:[%s0 + $0x8] sm:$0xf]
    %v39 = vld [vmem:[%s0 + $0xc] sm:$0xf]
    %v40 = vld [vmem:[%s0 + $0x10] sm:$0xf]
    %v41 = vld [vmem:[%s0 + $0x14] sm:$0xf]
    %v42 = vld [vmem:[%s0 + $0x18] sm:$0xf]
    %v43 = vld [vmem:[%s0 + $0x1c] sm:$0xf]
    %v44 = vld [vmem:[%s0 + $0x20] sm:$0xf]
    %v45 = vld [vmem:[%s0 + $0x24] sm:$0xf]
    %v46 = vld [vmem:[%s0 + $0x28] sm:$0xf]
    %v47 = vld [vmem:[%s0 + $0x2c] sm:$0xf]
    %v48 = vld [vmem:[%s0 + $0x30] sm:$0xf]
    %v49 = vld [vmem:[%s0 + $0x34] sm:$0xf]
    %v50 = vld [vmem:[%s0 + $0x38] sm:$0xf]
    %v51 = vld [vmem:[%s0 + $0x3c] sm:$0xf]
    %v68 = vunpack.c.l.b16 %v20
    %v69 = vunpack.c.l.b16 %v21
    %v70 = vunpack.c.l.b16 %v22
    %v71 = vunpack.c.l.b16 %v23
    %v72 = vunpack.c.l.b16 %v24
    %v73 = vunpack.c.l.b16 %v25
    %v74 = vunpack.c.l.b16 %v26
    %v75 = vunpack.c.l.b16 %v27
    %v76 = vunpack.c.l.b16 %v28
    %v77 = vunpack.c.l.b16 %v29
    %v78 = vunpack.c.l.b16 %v30
    %v79 = vunpack.c.l.b16 %v31
    %v80 = vunpack.c.l.b16 %v32
    %v81 = vunpack.c.l.b16 %v33
    %v82 = vunpack.c.l.b16 %v34
    %v83 = vunpack.c.l.b16 %v35
    %v84 = vpack.c.b16 %v69, %v68
    %v85 = vpack.c.b16 %v71, %v70
    %v86 = vpack.c.b16 %v73, %v72
    %v87 = vpack.c.b16 %v75, %v74
    %v88 = vpack.c.b16 %v77, %v76
    %v89 = vpack.c.b16 %v79, %v78
    %v90 = vpack.c.b16 %v81, %v80
    %v91 = vpack.c.b16 %v83, %v82
    %v108 = vunpack.c.l.b16 %v36
    %v109 = vunpack.c.l.b16 %v37
    %v110 = vunpack.c.l.b16 %v38
    %v111 = vunpack.c.l.b16 %v39
    %v112 = vunpack.c.l.b16 %v40
    %v113 = vunpack.c.l.b16 %v41
    %v114 = vunpack.c.l.b16 %v42
    %v115 = vunpack.c.l.b16 %v43
    %v116 = vunpack.c.l.b16 %v44
    %v117 = vunpack.c.l.b16 %v45
    %v118 = vunpack.c.l.b16 %v46
    %v119 = vunpack.c.l.b16 %v47
    %v120 = vunpack.c.l.b16 %v48
    %v121 = vunpack.c.l.b16 %v49
    %v122 = vunpack.c.l.b16 %v50
    %v123 = vunpack.c.l.b16 %v51
    %v124 = vpack.c.b16 %v109, %v108
    %v125 = vpack.c.b16 %v111, %v110
    %v126 = vpack.c.b16 %v113, %v112
    %v127 = vpack.c.b16 %v115, %v114
    %v128 = vpack.c.b16 %v117, %v116
    %v129 = vpack.c.b16 %v119, %v118
    %v130 = vpack.c.b16 %v121, %v120
    %v131 = vpack.c.b16 %v123, %v122
    %vm132 = vcmask 261120
    %v134 = vsel %vm132, %v84, 0
    %v137 = vsel %vm132, %v85, 0
    %v140 = vsel %vm132, %v86, 0
    %v143 = vsel %vm132, %v87, 0
    %v146 = vsel %vm132, %v88, 0
    %v149 = vsel %vm132, %v89, 0
    %v152 = vsel %vm132, %v90, 0
    %v155 = vsel %vm132, %v91, 0
    %v158 = vsel %vm132, %v124, 0
    %v161 = vsel %vm132, %v125, 0
    %v164 = vsel %vm132, %v126, 0
    %v167 = vsel %vm132, %v127, 0
    %v170 = vsel %vm132, %v128, 0
    %v173 = vsel %vm132, %v129, 0
    %v176 = vsel %vm132, %v130, 0
    %v179 = vsel %vm132, %v131, 0
    %181 = vmatpush.bf16.xpose.msra.mxu0 %v179
    %182 = vmatpush.bf16.xpose.msra.mxu0 %v176
    %183 = vmatpush.bf16.xpose.msra.mxu0 %v173
    %184 = vmatpush.bf16.xpose.msra.mxu0 %v170
    %185 = vmatpush.bf16.xpose.msra.mxu0 %v167
    %186 = vmatpush.bf16.xpose.msra.mxu0 %v164
    %187 = vmatpush.bf16.xpose.msra.mxu0 %v161
    %188 = vmatpush.bf16.xpose.msra.mxu0 %v158
    %189 = vmatmul.bf16.gmra.mxu0 %v134
    %v190 = vpop.f32.mrf.mxu0
    %v191 = vadd.f32 0.0, %v190
    %v192 = vpop.f32.mrf.mxu0
    %v193 = vadd.f32 0.0, %v192
    %194 = vmatmul.bf16.gmra.mxu0 %v137
    %v195 = vpop.f32.mrf.mxu0
    %v196 = vadd.f32 0.0, %v195
    %v197 = vpop.f32.mrf.mxu0
    %v198 = vadd.f32 0.0, %v197
    %199 = vmatmul.bf16.gmra.mxu0 %v140
    %v200 = vpop.f32.mrf.mxu0
    %v201 = vadd.f32 0.0, %v200
    %v202 = vpop.f32.mrf.mxu0
    %v203 = vadd.f32 0.0, %v202
    %204 = vmatmul.bf16.gmra.mxu0 %v143
    %v205 = vpop.f32.mrf.mxu0
    %v206 = vadd.f32 0.0, %v205
    %v207 = vpop.f32.mrf.mxu0
    %v208 = vadd.f32 0.0, %v207
    %209 = vmatmul.bf16.gmra.mxu0 %v146
    %v210 = vpop.f32.mrf.mxu0
    %v211 = vadd.f32 0.0, %v210
    %v212 = vpop.f32.mrf.mxu0
    %v213 = vadd.f32 0.0, %v212
    %214 = vmatmul.bf16.gmra.mxu0 %v149
    %v215 = vpop.f32.mrf.mxu0
    %v216 = vadd.f32 0.0, %v215
    %v217 = vpop.f32.mrf.mxu0
    %v218 = vadd.f32 0.0, %v217
    %219 = vmatmul.bf16.gmra.mxu0 %v152
    %v220 = vpop.f32.mrf.mxu0
    %v221 = vadd.f32 0.0, %v220
    %v222 = vpop.f32.mrf.mxu0
    %v223 = vadd.f32 0.0, %v222
    %224 = vmatmul.bf16.gmra.mxu0 %v155
    %v225 = vpop.f32.mrf.mxu0
    %v226 = vadd.f32 0.0, %v225
    %v227 = vpop.f32.mrf.mxu0
    %v228 = vadd.f32 0.0, %v227
    %229 = vdwg.mxu0
    %v230 = vld [vmem:[%s1] sm:$0xff]
    %v231 = vld [vmem:[%s1 + $0x8] sm:$0xff]
    %v232 = vld [vmem:[%s1 + $0x10] sm:$0xff]
    %v233 = vld [vmem:[%s1 + $0x18] sm:$0xff]
    %v234 = vld [vmem:[%s1 + $0x20] sm:$0xff]
    %v235 = vld [vmem:[%s1 + $0x28] sm:$0xff]
    %v236 = vld [vmem:[%s1 + $0x30] sm:$0xff]
    %v237 = vld [vmem:[%s1 + $0x38] sm:$0xff]
    %v238 = vld [vmem:[%s1 + $0x40] sm:$0xff]
    %v239 = vld [vmem:[%s1 + $0x48] sm:$0xff]
    %v240 = vld [vmem:[%s1 + $0x50] sm:$0xff]
    %v241 = vld [vmem:[%s1 + $0x58] sm:$0xff]
    %v242 = vld [vmem:[%s1 + $0x60] sm:$0xff]
    %v243 = vld [vmem:[%s1 + $0x68] sm:$0xff]
    %v244 = vld [vmem:[%s1 + $0x70] sm:$0xff]
    %v245 = vld [vmem:[%s1 + $0x78] sm:$0xff]
    %v246 = vld [vmem:[%s2] sm:$0x1]
    %247 = vset.pattern.permute.xlu0 0
    %248 = vperm.xlu0 %247, %v230
    %v249 = vpop.permute.xlu0 %248
    %250 = vset.pattern.permute.xlu0 0
    %251 = vperm.xlu0 %250, %v231
    %v252 = vpop.permute.xlu0 %251
    %253 = vset.pattern.permute.xlu0 0
    %254 = vperm.xlu0 %253, %v232
    %v255 = vpop.permute.xlu0 %254
    %256 = vset.pattern.permute.xlu0 0
    %257 = vperm.xlu0 %256, %v233
    %v258 = vpop.permute.xlu0 %257
    %259 = vset.pattern.permute.xlu0 0
    %260 = vperm.xlu0 %259, %v234
    %v261 = vpop.permute.xlu0 %260
    %262 = vset.pattern.permute.xlu0 0
    %263 = vperm.xlu0 %262, %v235
    %v264 = vpop.permute.xlu0 %263
    %265 = vset.pattern.permute.xlu0 0
    %266 = vperm.xlu0 %265, %v236
    %v267 = vpop.permute.xlu0 %266
    %268 = vset.pattern.permute.xlu0 0
    %269 = vperm.xlu0 %268, %v237
    %v270 = vpop.permute.xlu0 %269
    %271 = vset.pattern.permute.xlu0 0
    %272 = vperm.xlu0 %271, %v238
    %v273 = vpop.permute.xlu0 %272
    %274 = vset.pattern.permute.xlu0 0
    %275 = vperm.xlu0 %274, %v239
    %v276 = vpop.permute.xlu0 %275
    %277 = vset.pattern.permute.xlu0 0
    %278 = vperm.xlu0 %277, %v240
    %v279 = vpop.permute.xlu0 %278
    %280 = vset.pattern.permute.xlu0 0
    %281 = vperm.xlu0 %280, %v241
    %v282 = vpop.permute.xlu0 %281
    %283 = vset.pattern.permute.xlu0 0
    %284 = vperm.xlu0 %283, %v242
    %v285 = vpop.permute.xlu0 %284
    %286 = vset.pattern.permute.xlu0 0
    %287 = vperm.xlu0 %286, %v243
    %v288 = vpop.permute.xlu0 %287
    %289 = vset.pattern.permute.xlu0 0
    %290 = vperm.xlu0 %289, %v244
    %v291 = vpop.permute.xlu0 %290
    %292 = vset.pattern.permute.xlu0 0
    %293 = vperm.xlu0 %292, %v245
    %v294 = vpop.permute.xlu0 %293
    %v295 = vperm.slane %v246, 0
    %vm296 = vcmp.eq.s32.totalorder %v249, %v295
    %vm297 = vcmp.eq.s32.totalorder %v252, %v295
    %vm298 = vcmp.eq.s32.totalorder %v255, %v295
    %vm299 = vcmp.eq.s32.totalorder %v258, %v295
    %vm300 = vcmp.eq.s32.totalorder %v261, %v295
    %vm301 = vcmp.eq.s32.totalorder %v264, %v295
    %vm302 = vcmp.eq.s32.totalorder %v267, %v295
    %vm303 = vcmp.eq.s32.totalorder %v270, %v295
    %vm304 = vcmp.eq.s32.totalorder %v273, %v295
    %vm305 = vcmp.eq.s32.totalorder %v276, %v295
    %vm306 = vcmp.eq.s32.totalorder %v279, %v295
    %vm307 = vcmp.eq.s32.totalorder %v282, %v295
    %vm308 = vcmp.eq.s32.totalorder %v285, %v295
    %vm309 = vcmp.eq.s32.totalorder %v288, %v295
    %vm310 = vcmp.eq.s32.totalorder %v291, %v295
    %vm311 = vcmp.eq.s32.totalorder %v294, %v295
    %v312 = vlaneseq
    %v313 = vand.u32 %v312, 127
    %vm314 = vcmp.lt.s32.totalorder %v313, 8
    %v315 = vsel %vm314, 1, 0
    %vm316 = vcmp.eq.s32.totalorder %v315, 1
    %vm317 = vmand %vm296, %vm316
    %vm318 = vmand %vm297, %vm316
    %vm319 = vmand %vm298, %vm316
    %vm320 = vmand %vm299, %vm316
    %vm321 = vmand %vm300, %vm316
    %vm322 = vmand %vm301, %vm316
    %vm323 = vmand %vm302, %vm316
    %vm324 = vmand %vm303, %vm316
    %vm325 = vmand %vm304, %vm316
    %vm326 = vmand %vm305, %vm316
    %vm327 = vmand %vm306, %vm316
    %vm328 = vmand %vm307, %vm316
    %vm329 = vmand %vm308, %vm316
    %vm330 = vmand %vm309, %vm316
    %vm331 = vmand %vm310, %vm316
    %vm332 = vmand %vm311, %vm316
    %vm333 = vmxor %vm296, 1
    %vm334 = vmxor %vm297, 1
    %vm335 = vmxor %vm298, 1
    %vm336 = vmxor %vm299, 1
    %vm337 = vmxor %vm300, 1
    %vm338 = vmxor %vm301, 1
    %vm339 = vmxor %vm302, 1
    %vm340 = vmxor %vm303, 1
    %vm341 = vmxor %vm304, 1
    %vm342 = vmxor %vm305, 1
    %vm343 = vmxor %vm306, 1
    %vm344 = vmxor %vm307, 1
    %vm345 = vmxor %vm308, 1
    %vm346 = vmxor %vm309, 1
    %vm347 = vmxor %vm310, 1
    %vm348 = vmxor %vm311, 1
    %vm349 = vmand %vm333, %vm316
    %vm350 = vmand %vm334, %vm316
    %vm351 = vmand %vm335, %vm316
    %vm352 = vmand %vm336, %vm316
    %vm353 = vmand %vm337, %vm316
    %vm354 = vmand %vm338, %vm316
    %vm355 = vmand %vm339, %vm316
    %vm356 = vmand %vm340, %vm316
    %vm357 = vmand %vm341, %vm316
    %vm358 = vmand %vm342, %vm316
    %vm359 = vmand %vm343, %vm316
    %vm360 = vmand %vm344, %vm316
    %vm361 = vmand %vm345, %vm316
    %vm362 = vmand %vm346, %vm316
    %vm363 = vmand %vm347, %vm316
    %vm364 = vmand %vm348, %vm316
    %v365 = vsel %vm317, %v191, inf
    %v366 = vsel %vm318, %v193, inf
    %v367 = vsel %vm319, %v196, inf
    %v368 = vsel %vm320, %v198, inf
    %v369 = vsel %vm321, %v201, inf
    %v370 = vsel %vm322, %v203, inf
    %v371 = vsel %vm323, %v206, inf
    %v372 = vsel %vm324, %v208, inf
    %v373 = vsel %vm325, %v211, inf
    %v374 = vsel %vm326, %v213, inf
    %v375 = vsel %vm327, %v216, inf
    %v376 = vsel %vm328, %v218, inf
    %v377 = vsel %vm329, %v221, inf
    %v378 = vsel %vm330, %v223, inf
    %v379 = vsel %vm331, %v226, inf
    %v380 = vsel %vm332, %v228, inf
    %381 = vmin.xlane.f32.xlu0 %v365
    %v382 = vpop.xlane.xlu0 %381
    %383 = vmin.xlane.f32.xlu0 %v366
    %v384 = vpop.xlane.xlu0 %383
    %385 = vmin.xlane.f32.xlu0 %v367
    %v386 = vpop.xlane.xlu0 %385
    %387 = vmin.xlane.f32.xlu0 %v368
    %v388 = vpop.xlane.xlu0 %387
    %389 = vmin.xlane.f32.xlu0 %v369
    %v390 = vpop.xlane.xlu0 %389
    %391 = vmin.xlane.f32.xlu0 %v370
    %v392 = vpop.xlane.xlu0 %391
    %393 = vmin.xlane.f32.xlu0 %v371
    %v394 = vpop.xlane.xlu0 %393
    %395 = vmin.xlane.f32.xlu0 %v372
    %v396 = vpop.xlane.xlu0 %395
    %397 = vmin.xlane.f32.xlu0 %v373
    %v398 = vpop.xlane.xlu0 %397
    %399 = vmin.xlane.f32.xlu0 %v374
    %v400 = vpop.xlane.xlu0 %399
    %401 = vmin.xlane.f32.xlu0 %v375
    %v402 = vpop.xlane.xlu0 %401
    %403 = vmin.xlane.f32.xlu0 %v376
    %v404 = vpop.xlane.xlu0 %403
    %405 = vmin.xlane.f32.xlu0 %v377
    %v406 = vpop.xlane.xlu0 %405
    %407 = vmin.xlane.f32.xlu0 %v378
    %v408 = vpop.xlane.xlu0 %407
    %409 = vmin.xlane.f32.xlu0 %v379
    %v410 = vpop.xlane.xlu0 %409
    %411 = vmin.xlane.f32.xlu0 %v380
    %v412 = vpop.xlane.xlu0 %411
    %v413 = vsel %vm349, %v191, -inf
    %v414 = vsel %vm350, %v193, -inf
    %v415 = vsel %vm351, %v196, -inf
    %v416 = vsel %vm352, %v198, -inf
    %v417 = vsel %vm353, %v201, -inf
    %v418 = vsel %vm354, %v203, -inf
    %v419 = vsel %vm355, %v206, -inf
    %v420 = vsel %vm356, %v208, -inf
    %v421 = vsel %vm357, %v211, -inf
    %v422 = vsel %vm358, %v213, -inf
    %v423 = vsel %vm359, %v216, -inf
    %v424 = vsel %vm360, %v218, -inf
    %v425 = vsel %vm361, %v221, -inf
    %v426 = vsel %vm362, %v223, -inf
    %v427 = vsel %vm363, %v226, -inf
    %v428 = vsel %vm364, %v228, -inf
    %429 = vmax.xlane.f32.xlu0 %v413
    %v430 = vpop.xlane.xlu0 %429
    %431 = vmax.xlane.f32.xlu0 %v414
    %v432 = vpop.xlane.xlu0 %431
    %433 = vmax.xlane.f32.xlu0 %v415
    %v434 = vpop.xlane.xlu0 %433
    %435 = vmax.xlane.f32.xlu0 %v416
    %v436 = vpop.xlane.xlu0 %435
    %437 = vmax.xlane.f32.xlu0 %v417
    %v438 = vpop.xlane.xlu0 %437
    %439 = vmax.xlane.f32.xlu0 %v418
    %v440 = vpop.xlane.xlu0 %439
    %441 = vmax.xlane.f32.xlu0 %v419
    %v442 = vpop.xlane.xlu0 %441
    %443 = vmax.xlane.f32.xlu0 %v420
    %v444 = vpop.xlane.xlu0 %443
    %445 = vmax.xlane.f32.xlu0 %v421
    %v446 = vpop.xlane.xlu0 %445
    %447 = vmax.xlane.f32.xlu0 %v422
    %v448 = vpop.xlane.xlu0 %447
    %449 = vmax.xlane.f32.xlu0 %v423
    %v450 = vpop.xlane.xlu0 %449
    %451 = vmax.xlane.f32.xlu0 %v424
    %v452 = vpop.xlane.xlu0 %451
    %453 = vmax.xlane.f32.xlu0 %v425
    %v454 = vpop.xlane.xlu0 %453
    %455 = vmax.xlane.f32.xlu0 %v426
    %v456 = vpop.xlane.xlu0 %455
    %457 = vmax.xlane.f32.xlu0 %v427
    %v458 = vpop.xlane.xlu0 %457
    %459 = vmax.xlane.f32.xlu0 %v428
    %v460 = vpop.xlane.xlu0 %459
    %v461 = vsub.f32 0.5, %v382
    %v462 = vsub.f32 0.5, %v384
    %v463 = vsub.f32 0.5, %v386
    %v464 = vsub.f32 0.5, %v388
    %v465 = vsub.f32 0.5, %v390
    %v466 = vsub.f32 0.5, %v392
    %v467 = vsub.f32 0.5, %v394
    %v468 = vsub.f32 0.5, %v396
    %v469 = vsub.f32 0.5, %v398
    %v470 = vsub.f32 0.5, %v400
    %v471 = vsub.f32 0.5, %v402
    %v472 = vsub.f32 0.5, %v404
    %v473 = vsub.f32 0.5, %v406
    %v474 = vsub.f32 0.5, %v408
    %v475 = vsub.f32 0.5, %v410
    %v476 = vsub.f32 0.5, %v412
    %v477 = vmul.f32 %v461, 2.0
    %v478 = vmul.f32 %v462, 2.0
    %v479 = vmul.f32 %v463, 2.0
    %v480 = vmul.f32 %v464, 2.0
    %v481 = vmul.f32 %v465, 2.0
    %v482 = vmul.f32 %v466, 2.0
    %v483 = vmul.f32 %v467, 2.0
    %v484 = vmul.f32 %v468, 2.0
    %v485 = vmul.f32 %v469, 2.0
    %v486 = vmul.f32 %v470, 2.0
    %v487 = vmul.f32 %v471, 2.0
    %v488 = vmul.f32 %v472, 2.0
    %v489 = vmul.f32 %v473, 2.0
    %v490 = vmul.f32 %v474, 2.0
    %v491 = vmul.f32 %v475, 2.0
    %v492 = vmul.f32 %v476, 2.0
    %v493 = vmax.f32 %v477, 0.0
    %v494 = vmax.f32 %v478, 0.0
    %v495 = vmax.f32 %v479, 0.0
    %v496 = vmax.f32 %v480, 0.0
    %v497 = vmax.f32 %v481, 0.0
    %v498 = vmax.f32 %v482, 0.0
    %v499 = vmax.f32 %v483, 0.0
    %v500 = vmax.f32 %v484, 0.0
    %v501 = vmax.f32 %v485, 0.0
    %v502 = vmax.f32 %v486, 0.0
    %v503 = vmax.f32 %v487, 0.0
    %v504 = vmax.f32 %v488, 0.0
    %v505 = vmax.f32 %v489, 0.0
    %v506 = vmax.f32 %v490, 0.0
    %v507 = vmax.f32 %v491, 0.0
    %v508 = vmax.f32 %v492, 0.0
    %v509 = vsub.f32 %v430, 0.5
    %v510 = vsub.f32 %v432, 0.5
    %v511 = vsub.f32 %v434, 0.5
    %v512 = vsub.f32 %v436, 0.5
    %v513 = vsub.f32 %v438, 0.5
    %v514 = vsub.f32 %v440, 0.5
    %v515 = vsub.f32 %v442, 0.5
    %v516 = vsub.f32 %v444, 0.5
    %v517 = vsub.f32 %v446, 0.5
    %v518 = vsub.f32 %v448, 0.5
    %v519 = vsub.f32 %v450, 0.5
    %v520 = vsub.f32 %v452, 0.5
    %v521 = vsub.f32 %v454, 0.5
    %v522 = vsub.f32 %v456, 0.5
    %v523 = vsub.f32 %v458, 0.5
    %v524 = vsub.f32 %v460, 0.5
    %v525 = vmul.f32 %v509, 50.0
    %v526 = vmul.f32 %v510, 50.0
    %v527 = vmul.f32 %v511, 50.0
    %v528 = vmul.f32 %v512, 50.0
    %v529 = vmul.f32 %v513, 50.0
    %v530 = vmul.f32 %v514, 50.0
    %v531 = vmul.f32 %v515, 50.0
    %v532 = vmul.f32 %v516, 50.0
    %v533 = vmul.f32 %v517, 50.0
    %v534 = vmul.f32 %v518, 50.0
    %v535 = vmul.f32 %v519, 50.0
    %v536 = vmul.f32 %v520, 50.0
    %v537 = vmul.f32 %v521, 50.0
    %v538 = vmul.f32 %v522, 50.0
    %v539 = vmul.f32 %v523, 50.0
    %v540 = vmul.f32 %v524, 50.0
    %v541 = vmax.f32 %v525, 0.0
    %v542 = vmax.f32 %v526, 0.0
    %v543 = vmax.f32 %v527, 0.0
    %v544 = vmax.f32 %v528, 0.0
    %v545 = vmax.f32 %v529, 0.0
    %v546 = vmax.f32 %v530, 0.0
    %v547 = vmax.f32 %v531, 0.0
    %v548 = vmax.f32 %v532, 0.0
    %v549 = vmax.f32 %v533, 0.0
    %v550 = vmax.f32 %v534, 0.0
    %v551 = vmax.f32 %v535, 0.0
    %v552 = vmax.f32 %v536, 0.0
    %v553 = vmax.f32 %v537, 0.0
    %v554 = vmax.f32 %v538, 0.0
    %v555 = vmax.f32 %v539, 0.0
    %v556 = vmax.f32 %v540, 0.0
    %v557 = vadd.f32 %v430, 0.1
    %v558 = vadd.f32 %v432, 0.1
    %v559 = vadd.f32 %v434, 0.1
    %v560 = vadd.f32 %v436, 0.1
    %v561 = vadd.f32 %v438, 0.1
    %v562 = vadd.f32 %v440, 0.1
    %v563 = vadd.f32 %v442, 0.1
    %v564 = vadd.f32 %v444, 0.1
    %v565 = vadd.f32 %v446, 0.1
    %v566 = vadd.f32 %v448, 0.1
    %v567 = vadd.f32 %v450, 0.1
    %v568 = vadd.f32 %v452, 0.1
    %v569 = vadd.f32 %v454, 0.1
    %v570 = vadd.f32 %v456, 0.1
    %v571 = vadd.f32 %v458, 0.1
    %v572 = vadd.f32 %v460, 0.1
    %vm573 = vcmp.lt.f32.partialorder %v191, %v557
    %vm574 = vcmp.lt.f32.partialorder %v193, %v558
    %vm575 = vcmp.lt.f32.partialorder %v196, %v559
    %vm576 = vcmp.lt.f32.partialorder %v198, %v560
    %vm577 = vcmp.lt.f32.partialorder %v201, %v561
    %vm578 = vcmp.lt.f32.partialorder %v203, %v562
    %vm579 = vcmp.lt.f32.partialorder %v206, %v563
    %vm580 = vcmp.lt.f32.partialorder %v208, %v564
    %vm581 = vcmp.lt.f32.partialorder %v211, %v565
    %vm582 = vcmp.lt.f32.partialorder %v213, %v566
    %vm583 = vcmp.lt.f32.partialorder %v216, %v567
    %vm584 = vcmp.lt.f32.partialorder %v218, %v568
    %vm585 = vcmp.lt.f32.partialorder %v221, %v569
    %vm586 = vcmp.lt.f32.partialorder %v223, %v570
    %vm587 = vcmp.lt.f32.partialorder %v226, %v571
    %vm588 = vcmp.lt.f32.partialorder %v228, %v572
    %vm589 = vmand %vm317, %vm573
    %vm590 = vmand %vm318, %vm574
    %vm591 = vmand %vm319, %vm575
    %vm592 = vmand %vm320, %vm576
    %vm593 = vmand %vm321, %vm577
    %vm594 = vmand %vm322, %vm578
    %vm595 = vmand %vm323, %vm579
    %vm596 = vmand %vm324, %vm580
    %vm597 = vmand %vm325, %vm581
    %vm598 = vmand %vm326, %vm582
    %vm599 = vmand %vm327, %vm583
    %vm600 = vmand %vm328, %vm584
    %vm601 = vmand %vm329, %vm585
    %vm602 = vmand %vm330, %vm586
    %vm603 = vmand %vm331, %vm587
    %vm604 = vmand %vm332, %vm588
    %v605 = vsub.f32 1.0, %v493
    %v606 = vsub.f32 1.0, %v494
    %v607 = vsub.f32 1.0, %v495
    %v608 = vsub.f32 1.0, %v496
    %v609 = vsub.f32 1.0, %v497
    %v610 = vsub.f32 1.0, %v498
    %v611 = vsub.f32 1.0, %v499
    %v612 = vsub.f32 1.0, %v500
    %v613 = vsub.f32 1.0, %v501
    %v614 = vsub.f32 1.0, %v502
    %v615 = vsub.f32 1.0, %v503
    %v616 = vsub.f32 1.0, %v504
    %v617 = vsub.f32 1.0, %v505
    %v618 = vsub.f32 1.0, %v506
    %v619 = vsub.f32 1.0, %v507
    %v620 = vsub.f32 1.0, %v508
    %v621 = vmul.f32 %v191, 2.0
    %v622 = vmul.f32 %v193, 2.0
    %v623 = vmul.f32 %v196, 2.0
    %v624 = vmul.f32 %v198, 2.0
    %v625 = vmul.f32 %v201, 2.0
    %v626 = vmul.f32 %v203, 2.0
    %v627 = vmul.f32 %v206, 2.0
    %v628 = vmul.f32 %v208, 2.0
    %v629 = vmul.f32 %v211, 2.0
    %v630 = vmul.f32 %v213, 2.0
    %v631 = vmul.f32 %v216, 2.0
    %v632 = vmul.f32 %v218, 2.0
    %v633 = vmul.f32 %v221, 2.0
    %v634 = vmul.f32 %v223, 2.0
    %v635 = vmul.f32 %v226, 2.0
    %v636 = vmul.f32 %v228, 2.0
    %v637 = vsub.f32 %v605, %v621
    %v638 = vsub.f32 %v606, %v622
    %v639 = vsub.f32 %v607, %v623
    %v640 = vsub.f32 %v608, %v624
    %v641 = vsub.f32 %v609, %v625
    %v642 = vsub.f32 %v610, %v626
    %v643 = vsub.f32 %v611, %v627
    %v644 = vsub.f32 %v612, %v628
    %v645 = vsub.f32 %v613, %v629
    %v646 = vsub.f32 %v614, %v630
    %v647 = vsub.f32 %v615, %v631
    %v648 = vsub.f32 %v616, %v632
    %v649 = vsub.f32 %v617, %v633
    %v650 = vsub.f32 %v618, %v634
    %v651 = vsub.f32 %v619, %v635
    %v652 = vsub.f32 %v620, %v636
    %v653 = vsel %vm589, %v637, -inf
    %v654 = vsel %vm590, %v638, -inf
    %v655 = vsel %vm591, %v639, -inf
    %v656 = vsel %vm592, %v640, -inf
    %v657 = vsel %vm593, %v641, -inf
    %v658 = vsel %vm594, %v642, -inf
    %v659 = vsel %vm595, %v643, -inf
    %v660 = vsel %vm596, %v644, -inf
    %v661 = vsel %vm597, %v645, -inf
    %v662 = vsel %vm598, %v646, -inf
    %v663 = vsel %vm599, %v647, -inf
    %v664 = vsel %vm600, %v648, -inf
    %v665 = vsel %vm601, %v649, -inf
    %v666 = vsel %vm602, %v650, -inf
    %v667 = vsel %vm603, %v651, -inf
    %v668 = vsel %vm604, %v652, -inf
    %v669 = vsub.f32 %v382, 0.1
    %v670 = vsub.f32 %v384, 0.1
    %v671 = vsub.f32 %v386, 0.1
    %v672 = vsub.f32 %v388, 0.1
    %v673 = vsub.f32 %v390, 0.1
    %v674 = vsub.f32 %v392, 0.1
    %v675 = vsub.f32 %v394, 0.1
    %v676 = vsub.f32 %v396, 0.1
    %v677 = vsub.f32 %v398, 0.1
    %v678 = vsub.f32 %v400, 0.1
    %v679 = vsub.f32 %v402, 0.1
    %v680 = vsub.f32 %v404, 0.1
    %v681 = vsub.f32 %v406, 0.1
    %v682 = vsub.f32 %v408, 0.1
    %v683 = vsub.f32 %v410, 0.1
    %v684 = vsub.f32 %v412, 0.1
    %vm685 = vcmp.gt.f32.partialorder %v191, %v669
    %vm686 = vcmp.gt.f32.partialorder %v193, %v670
    %vm687 = vcmp.gt.f32.partialorder %v196, %v671
    %vm688 = vcmp.gt.f32.partialorder %v198, %v672
    %vm689 = vcmp.gt.f32.partialorder %v201, %v673
    %vm690 = vcmp.gt.f32.partialorder %v203, %v674
    %vm691 = vcmp.gt.f32.partialorder %v206, %v675
    %vm692 = vcmp.gt.f32.partialorder %v208, %v676
    %vm693 = vcmp.gt.f32.partialorder %v211, %v677
    %vm694 = vcmp.gt.f32.partialorder %v213, %v678
    %vm695 = vcmp.gt.f32.partialorder %v216, %v679
    %vm696 = vcmp.gt.f32.partialorder %v218, %v680
    %vm697 = vcmp.gt.f32.partialorder %v221, %v681
    %vm698 = vcmp.gt.f32.partialorder %v223, %v682
    %vm699 = vcmp.gt.f32.partialorder %v226, %v683
    %vm700 = vcmp.gt.f32.partialorder %v228, %v684
    %vm701 = vmand %vm349, %vm685
    %vm702 = vmand %vm350, %vm686
    %vm703 = vmand %vm351, %vm687
    %vm704 = vmand %vm352, %vm688
    %vm705 = vmand %vm353, %vm689
    %vm706 = vmand %vm354, %vm690
    %vm707 = vmand %vm355, %vm691
    %vm708 = vmand %vm356, %vm692
    %vm709 = vmand %vm357, %vm693
    %vm710 = vmand %vm358, %vm694
    %vm711 = vmand %vm359, %vm695
    %vm712 = vmand %vm360, %vm696
    %vm713 = vmand %vm361, %vm697
    %vm714 = vmand %vm362, %vm698
    %vm715 = vmand %vm363, %vm699
    %vm716 = vmand %vm364, %vm700
    %v717 = vmul.f32 %v191, 50.0
    %v718 = vmul.f32 %v193, 50.0
    %v719 = vmul.f32 %v196, 50.0
    %v720 = vmul.f32 %v198, 50.0
    %v721 = vmul.f32 %v201, 50.0
    %v722 = vmul.f32 %v203, 50.0
    %v723 = vmul.f32 %v206, 50.0
    %v724 = vmul.f32 %v208, 50.0
    %v725 = vmul.f32 %v211, 50.0
    %v726 = vmul.f32 %v213, 50.0
    %v727 = vmul.f32 %v216, 50.0
    %v728 = vmul.f32 %v218, 50.0
    %v729 = vmul.f32 %v221, 50.0
    %v730 = vmul.f32 %v223, 50.0
    %v731 = vmul.f32 %v226, 50.0
    %v732 = vmul.f32 %v228, 50.0
    %v733 = vadd.f32 %v541, 25.0
    %v734 = vadd.f32 %v542, 25.0
    %v735 = vadd.f32 %v543, 25.0
    %v736 = vadd.f32 %v544, 25.0
    %v737 = vadd.f32 %v545, 25.0
    %v738 = vadd.f32 %v546, 25.0
    %v739 = vadd.f32 %v547, 25.0
    %v740 = vadd.f32 %v548, 25.0
    %v741 = vadd.f32 %v549, 25.0
    %v742 = vadd.f32 %v550, 25.0
    %v743 = vadd.f32 %v551, 25.0
    %v744 = vadd.f32 %v552, 25.0
    %v745 = vadd.f32 %v553, 25.0
    %v746 = vadd.f32 %v554, 25.0
    %v747 = vadd.f32 %v555, 25.0
    %v748 = vadd.f32 %v556, 25.0
    %v749 = vsub.f32 %v717, %v733
    %v750 = vsub.f32 %v718, %v734
    %v751 = vsub.f32 %v719, %v735
    %v752 = vsub.f32 %v720, %v736
    %v753 = vsub.f32 %v721, %v737
    %v754 = vsub.f32 %v722, %v738
    %v755 = vsub.f32 %v723, %v739
    %v756 = vsub.f32 %v724, %v740
    %v757 = vsub.f32 %v725, %v741
    %v758 = vsub.f32 %v726, %v742
    %v759 = vsub.f32 %v727, %v743
    %v760 = vsub.f32 %v728, %v744
    %v761 = vsub.f32 %v729, %v745
    %v762 = vsub.f32 %v730, %v746
    %v763 = vsub.f32 %v731, %v747
    %v764 = vsub.f32 %v732, %v748
    %v765 = vsel %vm701, %v749, -inf
    %v766 = vsel %vm702, %v750, -inf
    %v767 = vsel %vm703, %v751, -inf
    %v768 = vsel %vm704, %v752, -inf
    %v769 = vsel %vm705, %v753, -inf
    %v770 = vsel %vm706, %v754, -inf
    %v771 = vsel %vm707, %v755, -inf
    %v772 = vsel %vm708, %v756, -inf
    %v773 = vsel %vm709, %v757, -inf
    %v774 = vsel %vm710, %v758, -inf
    %v775 = vsel %vm711, %v759, -inf
    %v776 = vsel %vm712, %v760, -inf
    %v777 = vsel %vm713, %v761, -inf
    %v778 = vsel %vm714, %v762, -inf
    %v779 = vsel %vm715, %v763, -inf
    %v780 = vsel %vm716, %v764, -inf
    %v781 = vmul.f32 %v653, 1.442695
    %v782 = vpow.pop %v781
    %v783 = vmul.f32 %v654, 1.442695
    %v784 = vpow.pop %v783
    %v785 = vmul.f32 %v655, 1.442695
    %v786 = vpow.pop %v785
    %v787 = vmul.f32 %v656, 1.442695
    %v788 = vpow.pop %v787
    %v789 = vmul.f32 %v657, 1.442695
    %v790 = vpow.pop %v789
    %v791 = vmul.f32 %v658, 1.442695
    %v792 = vpow.pop %v791
    %v793 = vmul.f32 %v659, 1.442695
    %v794 = vpow.pop %v793
    %v795 = vmul.f32 %v660, 1.442695
    %v796 = vpow.pop %v795
    %v797 = vmul.f32 %v661, 1.442695
    %v798 = vpow.pop %v797
    %v799 = vmul.f32 %v662, 1.442695
    %v800 = vpow.pop %v799
    %v801 = vmul.f32 %v663, 1.442695
    %v802 = vpow.pop %v801
    %v803 = vmul.f32 %v664, 1.442695
    %v804 = vpow.pop %v803
    %v805 = vmul.f32 %v665, 1.442695
    %v806 = vpow.pop %v805
    %v807 = vmul.f32 %v666, 1.442695
    %v808 = vpow.pop %v807
    %v809 = vmul.f32 %v667, 1.442695
    %v810 = vpow.pop %v809
    %v811 = vmul.f32 %v668, 1.442695
    %v812 = vpow.pop %v811
    %813 = vadd.xlane.f32.xlu0 %v782
    %v814 = vpop.xlane.xlu0 %813
    %815 = vadd.xlane.f32.xlu0 %v784
    %v816 = vpop.xlane.xlu0 %815
    %817 = vadd.xlane.f32.xlu0 %v786
    %v818 = vpop.xlane.xlu0 %817
    %819 = vadd.xlane.f32.xlu0 %v788
    %v820 = vpop.xlane.xlu0 %819
    %821 = vadd.xlane.f32.xlu0 %v790
    %v822 = vpop.xlane.xlu0 %821
    %823 = vadd.xlane.f32.xlu0 %v792
    %v824 = vpop.xlane.xlu0 %823
    %825 = vadd.xlane.f32.xlu0 %v794
    %v826 = vpop.xlane.xlu0 %825
    %827 = vadd.xlane.f32.xlu0 %v796
    %v828 = vpop.xlane.xlu0 %827
    %829 = vadd.xlane.f32.xlu0 %v798
    %v830 = vpop.xlane.xlu0 %829
    %831 = vadd.xlane.f32.xlu0 %v800
    %v832 = vpop.xlane.xlu0 %831
    %833 = vadd.xlane.f32.xlu0 %v802
    %v834 = vpop.xlane.xlu0 %833
    %835 = vadd.xlane.f32.xlu0 %v804
    %v836 = vpop.xlane.xlu0 %835
    %837 = vadd.xlane.f32.xlu0 %v806
    %v838 = vpop.xlane.xlu0 %837
    %839 = vadd.xlane.f32.xlu0 %v808
    %v840 = vpop.xlane.xlu0 %839
    %841 = vadd.xlane.f32.xlu0 %v810
    %v842 = vpop.xlane.xlu0 %841
    %843 = vadd.xlane.f32.xlu0 %v812
    %v844 = vpop.xlane.xlu0 %843
    %v845 = vsub.f32 0.0, %v493
    %v846 = vsub.f32 0.0, %v494
    %v847 = vsub.f32 0.0, %v495
    %v848 = vsub.f32 0.0, %v496
    %v849 = vsub.f32 0.0, %v497
    %v850 = vsub.f32 0.0, %v498
    %v851 = vsub.f32 0.0, %v499
    %v852 = vsub.f32 0.0, %v500
    %v853 = vsub.f32 0.0, %v501
    %v854 = vsub.f32 0.0, %v502
    %v855 = vsub.f32 0.0, %v503
    %v856 = vsub.f32 0.0, %v504
    %v857 = vsub.f32 0.0, %v505
    %v858 = vsub.f32 0.0, %v506
    %v859 = vsub.f32 0.0, %v507
    %v860 = vsub.f32 0.0, %v508
    %v861 = vmul.f32 %v845, 1.442695
    %v862 = vpow.pop %v861
    %v863 = vmul.f32 %v846, 1.442695
    %v864 = vpow.pop %v863
    %v865 = vmul.f32 %v847, 1.442695
    %v866 = vpow.pop %v865
    %v867 = vmul.f32 %v848, 1.442695
    %v868 = vpow.pop %v867
    %v869 = vmul.f32 %v849, 1.442695
    %v870 = vpow.pop %v869
    %v871 = vmul.f32 %v850, 1.442695
    %v872 = vpow.pop %v871
    %v873 = vmul.f32 %v851, 1.442695
    %v874 = vpow.pop %v873
    %v875 = vmul.f32 %v852, 1.442695
    %v876 = vpow.pop %v875
    %v877 = vmul.f32 %v853, 1.442695
    %v878 = vpow.pop %v877
    %v879 = vmul.f32 %v854, 1.442695
    %v880 = vpow.pop %v879
    %v881 = vmul.f32 %v855, 1.442695
    %v882 = vpow.pop %v881
    %v883 = vmul.f32 %v856, 1.442695
    %v884 = vpow.pop %v883
    %v885 = vmul.f32 %v857, 1.442695
    %v886 = vpow.pop %v885
    %v887 = vmul.f32 %v858, 1.442695
    %v888 = vpow.pop %v887
    %v889 = vmul.f32 %v859, 1.442695
    %v890 = vpow.pop %v889
    %v891 = vmul.f32 %v860, 1.442695
    %v892 = vpow.pop %v891
    %v893 = vadd.f32 %v814, %v862
    %v894 = vadd.f32 %v816, %v864
    %v895 = vadd.f32 %v818, %v866
    %v896 = vadd.f32 %v820, %v868
    %v897 = vadd.f32 %v822, %v870
    %v898 = vadd.f32 %v824, %v872
    %v899 = vadd.f32 %v826, %v874
    %v900 = vadd.f32 %v828, %v876
    %v901 = vadd.f32 %v830, %v878
    %v902 = vadd.f32 %v832, %v880
    %v903 = vadd.f32 %v834, %v882
    %v904 = vadd.f32 %v836, %v884
    %v905 = vadd.f32 %v838, %v886
    %v906 = vadd.f32 %v840, %v888
    %v907 = vadd.f32 %v842, %v890
    %v908 = vadd.f32 %v844, %v892
    %v909 = vmul.f32 %v765, 1.442695
    %v910 = vpow.pop %v909
    %v911 = vmul.f32 %v766, 1.442695
    %v912 = vpow.pop %v911
    %v913 = vmul.f32 %v767, 1.442695
    %v914 = vpow.pop %v913
    %v915 = vmul.f32 %v768, 1.442695
    %v916 = vpow.pop %v915
    %v917 = vmul.f32 %v769, 1.442695
    %v918 = vpow.pop %v917
    %v919 = vmul.f32 %v770, 1.442695
    %v920 = vpow.pop %v919
    %v921 = vmul.f32 %v771, 1.442695
    %v922 = vpow.pop %v921
    %v923 = vmul.f32 %v772, 1.442695
    %v924 = vpow.pop %v923
    %v925 = vmul.f32 %v773, 1.442695
    %v926 = vpow.pop %v925
    %v927 = vmul.f32 %v774, 1.442695
    %v928 = vpow.pop %v927
    %v929 = vmul.f32 %v775, 1.442695
    %v930 = vpow.pop %v929
    %v931 = vmul.f32 %v776, 1.442695
    %v932 = vpow.pop %v931
    %v933 = vmul.f32 %v777, 1.442695
    %v934 = vpow.pop %v933
    %v935 = vmul.f32 %v778, 1.442695
    %v936 = vpow.pop %v935
    %v937 = vmul.f32 %v779, 1.442695
    %v938 = vpow.pop %v937
    %v939 = vmul.f32 %v780, 1.442695
    %v940 = vpow.pop %v939
    %941 = vadd.xlane.f32.xlu0 %v910
    %v942 = vpop.xlane.xlu0 %941
    %943 = vadd.xlane.f32.xlu0 %v912
    %v944 = vpop.xlane.xlu0 %943
    %945 = vadd.xlane.f32.xlu0 %v914
    %v946 = vpop.xlane.xlu0 %945
    %947 = vadd.xlane.f32.xlu0 %v916
    %v948 = vpop.xlane.xlu0 %947
    %949 = vadd.xlane.f32.xlu0 %v918
    %v950 = vpop.xlane.xlu0 %949
    %951 = vadd.xlane.f32.xlu0 %v920
    %v952 = vpop.xlane.xlu0 %951
    %953 = vadd.xlane.f32.xlu0 %v922
    %v954 = vpop.xlane.xlu0 %953
    %955 = vadd.xlane.f32.xlu0 %v924
    %v956 = vpop.xlane.xlu0 %955
    %957 = vadd.xlane.f32.xlu0 %v926
    %v958 = vpop.xlane.xlu0 %957
    %959 = vadd.xlane.f32.xlu0 %v928
    %v960 = vpop.xlane.xlu0 %959
    %961 = vadd.xlane.f32.xlu0 %v930
    %v962 = vpop.xlane.xlu0 %961
    %963 = vadd.xlane.f32.xlu0 %v932
    %v964 = vpop.xlane.xlu0 %963
    %965 = vadd.xlane.f32.xlu0 %v934
    %v966 = vpop.xlane.xlu0 %965
    %967 = vadd.xlane.f32.xlu0 %v936
    %v968 = vpop.xlane.xlu0 %967
    %969 = vadd.xlane.f32.xlu0 %v938
    %v970 = vpop.xlane.xlu0 %969
    %971 = vadd.xlane.f32.xlu0 %v940
    %v972 = vpop.xlane.xlu0 %971
    %v973 = vsub.f32 0.0, %v541
    %v974 = vsub.f32 0.0, %v542
    %v975 = vsub.f32 0.0, %v543
    %v976 = vsub.f32 0.0, %v544
    %v977 = vsub.f32 0.0, %v545
    %v978 = vsub.f32 0.0, %v546
    %v979 = vsub.f32 0.0, %v547
    %v980 = vsub.f32 0.0, %v548
    %v981 = vsub.f32 0.0, %v549
    %v982 = vsub.f32 0.0, %v550
    %v983 = vsub.f32 0.0, %v551
    %v984 = vsub.f32 0.0, %v552
    %v985 = vsub.f32 0.0, %v553
    %v986 = vsub.f32 0.0, %v554
    %v987 = vsub.f32 0.0, %v555
    %v988 = vsub.f32 0.0, %v556
    %v989 = vmul.f32 %v973, 1.442695
    %v990 = vpow.pop %v989
    %v991 = vmul.f32 %v974, 1.442695
    %v992 = vpow.pop %v991
    %v993 = vmul.f32 %v975, 1.442695
    %v994 = vpow.pop %v993
    %v995 = vmul.f32 %v976, 1.442695
    %v996 = vpow.pop %v995
    %v997 = vmul.f32 %v977, 1.442695
    %v998 = vpow.pop %v997
    %v999 = vmul.f32 %v978, 1.442695
    %v1000 = vpow.pop %v999
    %v1001 = vmul.f32 %v979, 1.442695
    %v1002 = vpow.pop %v1001
    %v1003 = vmul.f32 %v980, 1.442695
    %v1004 = vpow.pop %v1003
    %v1005 = vmul.f32 %v981, 1.442695
    %v1006 = vpow.pop %v1005
    %v1007 = vmul.f32 %v982, 1.442695
    %v1008 = vpow.pop %v1007
    %v1009 = vmul.f32 %v983, 1.442695
    %v1010 = vpow.pop %v1009
    %v1011 = vmul.f32 %v984, 1.442695
    %v1012 = vpow.pop %v1011
    %v1013 = vmul.f32 %v985, 1.442695
    %v1014 = vpow.pop %v1013
    %v1015 = vmul.f32 %v986, 1.442695
    %v1016 = vpow.pop %v1015
    %v1017 = vmul.f32 %v987, 1.442695
    %v1018 = vpow.pop %v1017
    %v1019 = vmul.f32 %v988, 1.442695
    %v1020 = vpow.pop %v1019
    %v1021 = vadd.f32 %v942, %v990
    %v1022 = vadd.f32 %v944, %v992
    %v1023 = vadd.f32 %v946, %v994
    %v1024 = vadd.f32 %v948, %v996
    %v1025 = vadd.f32 %v950, %v998
    %v1026 = vadd.f32 %v952, %v1000
    %v1027 = vadd.f32 %v954, %v1002
    %v1028 = vadd.f32 %v956, %v1004
    %v1029 = vadd.f32 %v958, %v1006
    %v1030 = vadd.f32 %v960, %v1008
    %v1031 = vadd.f32 %v962, %v1010
    %v1032 = vadd.f32 %v964, %v1012
    %v1033 = vadd.f32 %v966, %v1014
    %v1034 = vadd.f32 %v968, %v1016
    %v1035 = vadd.f32 %v970, %v1018
    %v1036 = vadd.f32 %v972, %v1020
    %v1037 = vlog2.pop %v893
    %v1038 = vmul.f32 %v1037, 0.6931472
    %v1039 = vlog2.pop %v894
    %v1040 = vmul.f32 %v1039, 0.6931472
    %v1041 = vlog2.pop %v895
    %v1042 = vmul.f32 %v1041, 0.6931472
    %v1043 = vlog2.pop %v896
    %v1044 = vmul.f32 %v1043, 0.6931472
    %v1045 = vlog2.pop %v897
    %v1046 = vmul.f32 %v1045, 0.6931472
    %v1047 = vlog2.pop %v898
    %v1048 = vmul.f32 %v1047, 0.6931472
    %v1049 = vlog2.pop %v899
    %v1050 = vmul.f32 %v1049, 0.6931472
    %v1051 = vlog2.pop %v900
    %v1052 = vmul.f32 %v1051, 0.6931472
    %v1053 = vlog2.pop %v901
    %v1054 = vmul.f32 %v1053, 0.6931472
    %v1055 = vlog2.pop %v902
    %v1056 = vmul.f32 %v1055, 0.6931472
    %v1057 = vlog2.pop %v903
    %v1058 = vmul.f32 %v1057, 0.6931472
    %v1059 = vlog2.pop %v904
    %v1060 = vmul.f32 %v1059, 0.6931472
    %v1061 = vlog2.pop %v905
    %v1062 = vmul.f32 %v1061, 0.6931472
    %v1063 = vlog2.pop %v906
    %v1064 = vmul.f32 %v1063, 0.6931472
    %v1065 = vlog2.pop %v907
    %v1066 = vmul.f32 %v1065, 0.6931472
    %v1067 = vlog2.pop %v908
    %v1068 = vmul.f32 %v1067, 0.6931472
    %v1069 = vadd.f32 %v493, %v1038
    %v1070 = vadd.f32 %v494, %v1040
    %v1071 = vadd.f32 %v495, %v1042
    %v1072 = vadd.f32 %v496, %v1044
    %v1073 = vadd.f32 %v497, %v1046
    %v1074 = vadd.f32 %v498, %v1048
    %v1075 = vadd.f32 %v499, %v1050
    %v1076 = vadd.f32 %v500, %v1052
    %v1077 = vadd.f32 %v501, %v1054
    %v1078 = vadd.f32 %v502, %v1056
    %v1079 = vadd.f32 %v503, %v1058
    %v1080 = vadd.f32 %v504, %v1060
    %v1081 = vadd.f32 %v505, %v1062
    %v1082 = vadd.f32 %v506, %v1064
    %v1083 = vadd.f32 %v507, %v1066
    %v1084 = vadd.f32 %v508, %v1068
    %v1085 = vmul.f32 %v1069, 0.5
    %v1086 = vmul.f32 %v1070, 0.5
    %v1087 = vmul.f32 %v1071, 0.5
    %v1088 = vmul.f32 %v1072, 0.5
    %v1089 = vmul.f32 %v1073, 0.5
    %v1090 = vmul.f32 %v1074, 0.5
    %v1091 = vmul.f32 %v1075, 0.5
    %v1092 = vmul.f32 %v1076, 0.5
    %v1093 = vmul.f32 %v1077, 0.5
    %v1094 = vmul.f32 %v1078, 0.5
    %v1095 = vmul.f32 %v1079, 0.5
    %v1096 = vmul.f32 %v1080, 0.5
    %v1097 = vmul.f32 %v1081, 0.5
    %v1098 = vmul.f32 %v1082, 0.5
    %v1099 = vmul.f32 %v1083, 0.5
    %v1100 = vmul.f32 %v1084, 0.5
    %v1101 = vlog2.pop %v1021
    %v1102 = vmul.f32 %v1101, 0.6931472
    %v1103 = vlog2.pop %v1022
    %v1104 = vmul.f32 %v1103, 0.6931472
    %v1105 = vlog2.pop %v1023
    %v1106 = vmul.f32 %v1105, 0.6931472
    %v1107 = vlog2.pop %v1024
    %v1108 = vmul.f32 %v1107, 0.6931472
    %v1109 = vlog2.pop %v1025
    %v1110 = vmul.f32 %v1109, 0.6931472
    %v1111 = vlog2.pop %v1026
    %v1112 = vmul.f32 %v1111, 0.6931472
    %v1113 = vlog2.pop %v1027
    %v1114 = vmul.f32 %v1113, 0.6931472
    %v1115 = vlog2.pop %v1028
    %v1116 = vmul.f32 %v1115, 0.6931472
    %v1117 = vlog2.pop %v1029
    %v1118 = vmul.f32 %v1117, 0.6931472
    %v1119 = vlog2.pop %v1030
    %v1120 = vmul.f32 %v1119, 0.6931472
    %v1121 = vlog2.pop %v1031
    %v1122 = vmul.f32 %v1121, 0.6931472
    %v1123 = vlog2.pop %v1032
    %v1124 = vmul.f32 %v1123, 0.6931472
    %v1125 = vlog2.pop %v1033
    %v1126 = vmul.f32 %v1125, 0.6931472
    %v1127 = vlog2.pop %v1034
    %v1128 = vmul.f32 %v1127, 0.6931472
    %v1129 = vlog2.pop %v1035
    %v1130 = vmul.f32 %v1129, 0.6931472
    %v1131 = vlog2.pop %v1036
    %v1132 = vmul.f32 %v1131, 0.6931472
    %v1133 = vadd.f32 %v541, %v1102
    %v1134 = vadd.f32 %v542, %v1104
    %v1135 = vadd.f32 %v543, %v1106
    %v1136 = vadd.f32 %v544, %v1108
    %v1137 = vadd.f32 %v545, %v1110
    %v1138 = vadd.f32 %v546, %v1112
    %v1139 = vadd.f32 %v547, %v1114
    %v1140 = vadd.f32 %v548, %v1116
    %v1141 = vadd.f32 %v549, %v1118
    %v1142 = vadd.f32 %v550, %v1120
    %v1143 = vadd.f32 %v551, %v1122
    %v1144 = vadd.f32 %v552, %v1124
    %v1145 = vadd.f32 %v553, %v1126
    %v1146 = vadd.f32 %v554, %v1128
    %v1147 = vadd.f32 %v555, %v1130
    %v1148 = vadd.f32 %v556, %v1132
    %v1149 = vmul.f32 %v1133, 0.02
    %v1150 = vmul.f32 %v1134, 0.02
    %v1151 = vmul.f32 %v1135, 0.02
    %v1152 = vmul.f32 %v1136, 0.02
    %v1153 = vmul.f32 %v1137, 0.02
    %v1154 = vmul.f32 %v1138, 0.02
    %v1155 = vmul.f32 %v1139, 0.02
    %v1156 = vmul.f32 %v1140, 0.02
    %v1157 = vmul.f32 %v1141, 0.02
    %v1158 = vmul.f32 %v1142, 0.02
    %v1159 = vmul.f32 %v1143, 0.02
    %v1160 = vmul.f32 %v1144, 0.02
    %v1161 = vmul.f32 %v1145, 0.02
    %v1162 = vmul.f32 %v1146, 0.02
    %v1163 = vmul.f32 %v1147, 0.02
    %v1164 = vmul.f32 %v1148, 0.02
    %v1165 = vadd.f32 %v1085, %v1149
    %v1166 = vadd.f32 %v1086, %v1150
    %v1167 = vadd.f32 %v1087, %v1151
    %v1168 = vadd.f32 %v1088, %v1152
    %v1169 = vadd.f32 %v1089, %v1153
    %v1170 = vadd.f32 %v1090, %v1154
    %v1171 = vadd.f32 %v1091, %v1155
    %v1172 = vadd.f32 %v1092, %v1156
    %v1173 = vadd.f32 %v1093, %v1157
    %v1174 = vadd.f32 %v1094, %v1158
    %v1175 = vadd.f32 %v1095, %v1159
    %v1176 = vadd.f32 %v1096, %v1160
    %v1177 = vadd.f32 %v1097, %v1161
    %v1178 = vadd.f32 %v1098, %v1162
    %v1179 = vadd.f32 %v1099, %v1163
    %v1180 = vadd.f32 %v1100, %v1164
    %v1181 = vlaneseq
    %v1182 = vshrl.u32 %v1181, 7
    %v1183 = vadd.s32 %v1182, 8
    %v1184 = vadd.s32 %v1182, 16
    %v1185 = vadd.s32 %v1182, 24
    %v1186 = vadd.s32 %v1182, 32
    %v1187 = vadd.s32 %v1182, 40
    %v1188 = vadd.s32 %v1182, 48
    %v1189 = vadd.s32 %v1182, 56
    %v1190 = vadd.s32 %v1182, 64
    %v1191 = vadd.s32 %v1182, 72
    %v1192 = vadd.s32 %v1182, 80
    %v1193 = vadd.s32 %v1182, 88
    %v1194 = vadd.s32 %v1182, 96
    %v1195 = vadd.s32 %v1182, 104
    %v1196 = vadd.s32 %v1182, 112
    %v1197 = vadd.s32 %v1182, 120
    %v1198 = vstv %s15
    %v1199 = vadd.s32 %v1198, %v1182
    %v1200 = vadd.s32 %v1198, %v1183
    %v1201 = vadd.s32 %v1198, %v1184
    %v1202 = vadd.s32 %v1198, %v1185
    %v1203 = vadd.s32 %v1198, %v1186
    %v1204 = vadd.s32 %v1198, %v1187
    %v1205 = vadd.s32 %v1198, %v1188
    %v1206 = vadd.s32 %v1198, %v1189
    %v1207 = vadd.s32 %v1198, %v1190
    %v1208 = vadd.s32 %v1198, %v1191
    %v1209 = vadd.s32 %v1198, %v1192
    %v1210 = vadd.s32 %v1198, %v1193
    %v1211 = vadd.s32 %v1198, %v1194
    %v1212 = vadd.s32 %v1198, %v1195
    %v1213 = vadd.s32 %v1198, %v1196
    %v1214 = vadd.s32 %v1198, %v1197
    %vm1215 = vcmp.lt.s32.totalorder %v1199, 8
    %vm1216 = vcmp.lt.s32.totalorder %v1200, 8
    %vm1217 = vcmp.lt.s32.totalorder %v1201, 8
    %vm1218 = vcmp.lt.s32.totalorder %v1202, 8
    %vm1219 = vcmp.lt.s32.totalorder %v1203, 8
    %vm1220 = vcmp.lt.s32.totalorder %v1204, 8
    %vm1221 = vcmp.lt.s32.totalorder %v1205, 8
    %vm1222 = vcmp.lt.s32.totalorder %v1206, 8
    %vm1223 = vcmp.lt.s32.totalorder %v1207, 8
    %vm1224 = vcmp.lt.s32.totalorder %v1208, 8
    %vm1225 = vcmp.lt.s32.totalorder %v1209, 8
    %vm1226 = vcmp.lt.s32.totalorder %v1210, 8
    %vm1227 = vcmp.lt.s32.totalorder %v1211, 8
    %vm1228 = vcmp.lt.s32.totalorder %v1212, 8
    %vm1229 = vcmp.lt.s32.totalorder %v1213, 8
    %vm1230 = vcmp.lt.s32.totalorder %v1214, 8
    %v1231 = vsel %vm1215, %v1165, 0.0
    %v1232 = vsel %vm1216, %v1166, 0.0
    %v1233 = vsel %vm1217, %v1167, 0.0
    %v1234 = vsel %vm1218, %v1168, 0.0
    %v1235 = vsel %vm1219, %v1169, 0.0
    %v1236 = vsel %vm1220, %v1170, 0.0
    %v1237 = vsel %vm1221, %v1171, 0.0
    %v1238 = vsel %vm1222, %v1172, 0.0
    %v1239 = vsel %vm1223, %v1173, 0.0
    %v1240 = vsel %vm1224, %v1174, 0.0
    %v1241 = vsel %vm1225, %v1175, 0.0
    %v1242 = vsel %vm1226, %v1176, 0.0
    %v1243 = vsel %vm1227, %v1177, 0.0
    %v1244 = vsel %vm1228, %v1178, 0.0
    %v1245 = vsel %vm1229, %v1179, 0.0
    %v1246 = vsel %vm1230, %v1180, 0.0
    %v1247 = vadd.f32 %v1231, %v1232
    %v1248 = vadd.f32 %v1247, %v1233
    %v1249 = vadd.f32 %v1248, %v1234
    %v1250 = vadd.f32 %v1249, %v1235
    %v1251 = vadd.f32 %v1250, %v1236
    %v1252 = vadd.f32 %v1251, %v1237
    %v1253 = vadd.f32 %v1252, %v1238
    %v1254 = vadd.f32 %v1253, %v1239
    %v1255 = vadd.f32 %v1254, %v1240
    %v1256 = vadd.f32 %v1255, %v1241
    %v1257 = vadd.f32 %v1256, %v1242
    %v1258 = vadd.f32 %v1257, %v1243
    %v1259 = vadd.f32 %v1258, %v1244
    %v1260 = vadd.f32 %v1259, %v1245
    %v1261 = vadd.f32 %v1260, %v1246
    %v1262 = vrot.slane %v1261, 4
    %v1263 = vadd.f32 %v1261, %v1262
    %v1264 = vrot.slane %v1263, 2
    %v1265 = vadd.f32 %v1263, %v1264
    %v1266 = vrot.slane %v1265, 1
    %v1267 = vadd.f32 %v1265, %v1266
    %1268 = vst [vmem:[#allocation2] sm:$0xff] %v1267
    // Predicated region
    $region14: #{tpu_custom_call.1} parent=1 // pred_check
      _
    $region15: #{tpu_custom_call.1} parent=1 // pred_check_branch
      %1270 = sbr.rel (0) target = $region17
    $region16: #{tpu_custom_call.1} parent=1 // pred_region
      %1272 = vsyncadd [#allocation3], 0
      %s1274 = sshll.u32 [#allocation2], 4
      %s1275 = int_to_ptr.vmem [resolvable:$true] %s1274
      %s1276 = sshll.u32 %s3, 4
      %s1277 = int_to_ptr.hbm [resolvable:$true] %s1276
      %1279 = dma.vmem_to_hbm [thread:$0]  %s1275, 128, %s1277, [#allocation3]
    $region17: #{tpu_custom_call.1} parent=1 // pred_fallthru
      _
    // Predicated region
    $region18: #{tpu_custom_call.1} parent=1 // pred_check
      _
    $region19: #{tpu_custom_call.1} parent=1 // pred_check_branch
      %1281 = sbr.rel (0) target = $region21
    $region20: #{tpu_custom_call.1} parent=1 // pred_region
      %1283 = dma.done [#allocation3], 128
    $region21: #{tpu_custom_call.1} parent=1 // pred_fallthru
      _
    %1284 = vsyncpa [#allocation3], 1

</llo_original>
